<compile_context>
chip_gen: v7x
topology: tpu7x:2x2x1
jax: 0.10.0
libtpu: 0.0.40
codegen_flags: <defaults>
</compile_context>

<pallas_src>
import jax
import jax.numpy as jnp
import numpy as np
from jax.experimental import pallas as pl
from jax.experimental.pallas import tpu as pltpu


def _round_up(a, m):
    return ((a + m - 1) // m) * m


def _block_diag(w, p):
    """(din, dout) -> (p*din, p*dout) with p copies of w on the diagonal (zeros elsewhere)."""
    if p == 1:
        return w
    din, dout = w.shape
    out = jnp.zeros((p * din, p * dout), w.dtype)
    for k in range(p):  # p is a small Python int; unrolled at trace time (one-time wrapper cost)
        out = out.at[k * din:(k + 1) * din, k * dout:(k + 1) * dout].set(w)
    return out


def mlp_kernel(x_ref, w1_ref, b1_ref, w2_ref, b2_ref, o_ref):
    # Two MXU matmuls with f32 accumulation + VPU bias-add / ReLU, all resident in VMEM.
    x = x_ref[...]                                                    # (tr, P*D_in)
    h = jnp.dot(x, w1_ref[...], preferred_element_type=jnp.float32)   # (tr, P*H), f32 acc
    h = jnp.maximum(h + b1_ref[...].astype(jnp.float32), 0.0)         # bias + ReLU in f32
    h = h.astype(w2_ref.dtype)                                        # storage dtype for 2nd MXU pass
    y = jnp.dot(h, w2_ref[...], preferred_element_type=jnp.float32)   # (tr, P*D_out), f32 acc
    y = y + b2_ref[...].astype(jnp.float32)
    o_ref[...] = y.astype(o_ref.dtype)


def simple_network_forward(x, w1, b1, w2, b2, *, block_b=32768):
    """relu(x @ w1 + b1) @ w2 + b2  (SimpleNetwork.forward).

    x: (B, D_in); w1: (D_in, H); b1: (1, H); w2: (H, D_out); b2: (1, D_out).
    Output dtype follows x.dtype.  Pass bf16 x / w1 / w2 to halve HBM traffic; all
    accumulation stays f32.
    """
    B, D_in = x.shape
    H = w1.shape[1]
    D_out = w2.shape[1]
    itemsize = x.dtype.itemsize

    # ---- Lane packing: fold P=8 logical rows into one physical row (free row-major reshape)
    # so tiles are lane-dense; weights become block-diagonal, biases are tiled P times.
    P = 8 if (B % 8 == 0 and max(D_in, H, D_out) <= 128) else 1
    Bp = B // P
    in_cols, hid_cols, out_cols = P * D_in, P * H, P * D_out

    xp = x.reshape(Bp, in_cols)
    w1p = _block_diag(w1.astype(x.dtype), P)
    b1p = jnp.tile(b1, (1, P))
    w2p = _block_diag(w2.astype(x.dtype), P)
    b2p = jnp.tile(b2, (1, P))

    # ---- Row-tile size: lane-padding-aware VMEM accounting (double-buffered x/out tiles +
    # f32 intermediates within ~12 MiB) and a cap guaranteeing >=4 grid steps when possible
    # so v7x can shard the "parallel" batch axis over both TensorCores.
    in_pad = _round_up(in_cols, 128)
    hid_pad = _round_up(hid_cols, 128)
    out_pad = _round_up(out_cols, 128)
    if Bp <= 8:
        tr = Bp                                   # tiny batch: single block = full array
    else:
        per_row = 2 * (in_pad + out_pad) * itemsize + 4 * (in_pad + hid_pad + out_pad)
        vmem_cap = max(8, ((12 << 20) // per_row) // 8 * 8)
        core_cap = _round_up(pl.cdiv(Bp, 4), 8)   # >= 4 grid steps (v7x megacore sharding)
        user_cap = max(8, _round_up(block_b // P, 8))
        tr = max(8, min(vmem_cap, core_cap, user_cap))
    grid = (pl.cdiv(Bp, tr),)                     # ragged last block handled by Pallas masking

    out_p = pl.pallas_call(
        mlp_kernel,
        out_shape=jax.ShapeDtypeStruct((Bp, out_cols), x.dtype),
        grid=grid,
        in_specs=[
            pl.BlockSpec((tr, in_cols), lambda i: (i, 0)),        # x: tiled over (packed) batch
            pl.BlockSpec((in_cols, hid_cols), lambda i: (0, 0)),  # weights/biases resident in VMEM
            pl.BlockSpec((1, hid_cols), lambda i: (0, 0)),
            pl.BlockSpec((hid_cols, out_cols), lambda i: (0, 0)),
            pl.BlockSpec((1, out_cols), lambda i: (0, 0)),
        ],
        out_specs=pl.BlockSpec((tr, out_cols), lambda i: (i, 0)),
        compiler_params=pltpu.CompilerParams(
            dimension_semantics=("parallel",),                    # v7x: shard batch over 2 TCs
            vmem_limit_bytes=32 * 1024 * 1024,
        ),
        cost_estimate=pl.CostEstimate(
            flops=int(2 * B * (D_in * H + H * D_out)),
            transcendentals=0,
            bytes_accessed=int(
                xp.size * xp.dtype.itemsize
                + w1p.size * w1p.dtype.itemsize + b1p.size * b1p.dtype.itemsize
                + w2p.size * w2p.dtype.itemsize + b2p.size * b2p.dtype.itemsize
                + Bp * out_cols * itemsize
            ),
        ),
    )(xp, w1p, b1p, w2p, b2p)

    return out_p.reshape(B, D_out)


def init_params(key, input_size, hidden, output_size):
    # PyTorch nn.Linear default init: U[-1/sqrt(fan_in), 1/sqrt(fan_in)]
    k1, k2, k3, k4 = jax.random.split(key, 4)
    bound1 = 1.0 / np.sqrt(input_size)
    bound2 = 1.0 / np.sqrt(hidden)
    w1 = jax.random.uniform(k1, (input_size, hidden), jnp.float32, -bound1, bound1)
    b1 = jax.random.uniform(k2, (1, hidden), jnp.float32, -bound1, bound1)
    w2 = jax.random.uniform(k3, (hidden, output_size), jnp.float32, -bound2, bound2)
    b2 = jax.random.uniform(k4, (1, output_size), jnp.float32, -bound2, bound2)
    return w1, b1, w2, b2


if __name__ == "__main__":
    key = jax.random.PRNGKey(0)
    kx, kp, kx2, kx3 = jax.random.split(key, 4)

    input_size, hidden, output_size = 16, 32, 4
    w1, b1, w2, b2 = init_params(kp, input_size, hidden, output_size)

    fwd = jax.jit(simple_network_forward, static_argnames=("block_b",))

    def ref_fwd(x, w1, b1, w2, b2):
        return jnp.maximum(x @ w1 + b1, 0.0) @ w2 + b2

    # 1) Small f32 case matching the module's toy usage: batch=8 (single lane-packed block).
    x = jax.random.normal(kx, (8, input_size), jnp.float32)
    out = jax.block_until_ready(fwd(x, w1, b1, w2, b2))
    np.testing.assert_allclose(np.asarray(out), np.asarray(ref_fwd(x, w1, b1, w2, b2)),
                               rtol=1e-4, atol=1e-4)

    # 2) Larger f32 batch: multi-step "parallel" grid with a ragged (masked) last block, no pad.
    xb = jax.random.normal(kx2, (1000, input_size), jnp.float32)
    outb = jax.block_until_ready(fwd(xb, w1, b1, w2, b2))
    np.testing.assert_allclose(np.asarray(outb), np.asarray(ref_fwd(xb, w1, b1, w2, b2)),
                               rtol=1e-4, atol=1e-4)

    # 3) Recommended storage path: bf16 x / w1 / w2 and bf16 output (halves HBM traffic on this
    #    mem-bound kernel); f32 accumulation + f32 bias/ReLU inside.
    xh = xb.astype(jnp.bfloat16)
    w1h, w2h = w1.astype(jnp.bfloat16), w2.astype(jnp.bfloat16)
    outh = jax.block_until_ready(fwd(xh, w1h, b1, w2h, b2))
    refh = ref_fwd(xh.astype(jnp.float32), w1h.astype(jnp.float32), b1,
                   w2h.astype(jnp.float32), b2)
    np.testing.assert_allclose(np.asarray(outh, dtype=np.float32), np.asarray(refh),
                               rtol=2e-2, atol=2e-2)

    # 4) Batch not divisible by 8: unpacked fallback path, still pad-free with a ragged tail.
    xo = jax.random.normal(kx3, (203, input_size), jnp.float32)
    outo = jax.block_until_ready(fwd(xo, w1, b1, w2, b2))
    np.testing.assert_allclose(np.asarray(outo), np.asarray(ref_fwd(xo, w1, b1, w2, b2)),
                               rtol=1e-4, atol=1e-4)

    print("KERNEL_OK")
</pallas_src>

<mosaic_0001>
module attributes {stable_mosaic.version = 11 : i64} {
  func.func @mlp_kernel(%arg0: i32, %arg1: memref<1x128xf32, #tpu.memory_space<vmem>>, %arg2: memref<128x256xf32, #tpu.memory_space<vmem>>, %arg3: memref<1x256xf32, #tpu.memory_space<vmem>>, %arg4: memref<256x32xf32, #tpu.memory_space<vmem>>, %arg5: memref<1x32xf32, #tpu.memory_space<vmem>>, %arg6: memref<1x32xf32, #tpu.memory_space<vmem>>) attributes {dimension_semantics = [#tpu.dimension_semantics<parallel>], iteration_bounds = array<i64: 1>, scalar_prefetch = 0 : i64, scratch_operands = 0 : i64, tpu.core_type = #tpu.core_type<tc>, window_params = [{transform_indices = @transform_0, window_bounds = array<i64: 1, 128>}, {pipeline_mode = #tpu.pipeline_mode<synchronous>, transform_indices = @transform_1, window_bounds = array<i64: 128, 256>}, {pipeline_mode = #tpu.pipeline_mode<synchronous>, transform_indices = @transform_2, window_bounds = array<i64: 1, 256>}, {pipeline_mode = #tpu.pipeline_mode<synchronous>, transform_indices = @transform_3, window_bounds = array<i64: 256, 32>}, {pipeline_mode = #tpu.pipeline_mode<synchronous>, transform_indices = @transform_4, window_bounds = array<i64: 1, 32>}, {transform_indices = @transform_5, window_bounds = array<i64: 1, 32>}]} {
    %c0 = arith.constant 0 : index
    %c0_0 = arith.constant 0 : index
    %0 = vector.load %arg1[%c0, %c0_0] : memref<1x128xf32, #tpu.memory_space<vmem>>, vector<1x128xf32>
    %c0_1 = arith.constant 0 : index
    %c0_2 = arith.constant 0 : index
    %1 = vector.load %arg2[%c0_1, %c0_2] : memref<128x256xf32, #tpu.memory_space<vmem>>, vector<128x256xf32>
    %cst = arith.constant dense<0.000000e+00> : vector<1x256xf32>
    %2 = tpu.matmul %0, %1, %cst {dimension_numbers = #tpu.dot_dimension_numbers<[1], [0], [0], [1], [0, 0, 1, 1], [], []>} : vector<1x128xf32>, vector<128x256xf32>, vector<1x256xf32> -> vector<1x256xf32>
    %c0_3 = arith.constant 0 : index
    %c0_4 = arith.constant 0 : index
    %3 = vector.load %arg3[%c0_3, %c0_4] : memref<1x256xf32, #tpu.memory_space<vmem>>, vector<1x256xf32>
    %4 = arith.addf %2, %3 : vector<1x256xf32>
    %cst_5 = arith.constant 0.000000e+00 : f32
    %5 = vector.broadcast %cst_5 : f32 to vector<1x256xf32>
    %6 = arith.maximumf %4, %5 : vector<1x256xf32>
    %c0_6 = arith.constant 0 : index
    %c0_7 = arith.constant 0 : index
    %7 = vector.load %arg4[%c0_6, %c0_7] : memref<256x32xf32, #tpu.memory_space<vmem>>, vector<256x32xf32>
    %cst_8 = arith.constant dense<0.000000e+00> : vector<1x32xf32>
    %8 = tpu.matmul %6, %7, %cst_8 {dimension_numbers = #tpu.dot_dimension_numbers<[1], [0], [0], [1], [0, 0, 1, 1], [], []>} : vector<1x256xf32>, vector<256x32xf32>, vector<1x32xf32> -> vector<1x32xf32>
    %c0_9 = arith.constant 0 : index
    %c0_10 = arith.constant 0 : index
    %9 = vector.load %arg5[%c0_9, %c0_10] : memref<1x32xf32, #tpu.memory_space<vmem>>, vector<1x32xf32>
    %10 = arith.addf %8, %9 : vector<1x32xf32>
    %c0_11 = arith.constant 0 : index
    %c0_12 = arith.constant 0 : index
    %11 = vector.load %arg6[%c0_11, %c0_12] : memref<1x32xf32, #tpu.memory_space<vmem>>, vector<1x32xf32>
    tpu.vector_store %arg6[%c0_11, %c0_12], %10 {strides = array<i32>} : memref<1x32xf32, #tpu.memory_space<vmem>>, vector<1x32xf32>,
    return
  }
  func.func @transform_0(%arg0: i32) -> (i32, i32) {
    %c0_i32 = arith.constant 0 : i32
    %c0_i32_0 = arith.constant 0 : i32
    return %arg0, %c0_i32 : i32, i32
  }
  func.func @transform_1(%arg0: i32) -> (i32, i32) {
    %c0_i32 = arith.constant 0 : i32
    %c0_i32_0 = arith.constant 0 : i32
    %c0_i32_1 = arith.constant 0 : i32
    return %c0_i32, %c0_i32_0 : i32, i32
  }
  func.func @transform_2(%arg0: i32) -> (i32, i32) {
    %c0_i32 = arith.constant 0 : i32
    %c0_i32_0 = arith.constant 0 : i32
    %c0_i32_1 = arith.constant 0 : i32
    return %c0_i32, %c0_i32_0 : i32, i32
  }
  func.func @transform_3(%arg0: i32) -> (i32, i32) {
    %c0_i32 = arith.constant 0 : i32
    %c0_i32_0 = arith.constant 0 : i32
    %c0_i32_1 = arith.constant 0 : i32
    return %c0_i32, %c0_i32_0 : i32, i32
  }
  func.func @transform_4(%arg0: i32) -> (i32, i32) {
    %c0_i32 = arith.constant 0 : i32
    %c0_i32_0 = arith.constant 0 : i32
    %c0_i32_1 = arith.constant 0 : i32
    return %c0_i32, %c0_i32_0 : i32, i32
  }
  func.func @transform_5(%arg0: i32) -> (i32, i32) {
    %c0_i32 = arith.constant 0 : i32
    %c0_i32_0 = arith.constant 0 : i32
    return %arg0, %c0_i32 : i32, i32
  }
}

</mosaic_0001>

<llo_original>
// kernel: simple_network_forward.1
$region0: #{simple_network_forward.1}
  #allocation0 [shape = 'u32[]', space=smem, size = 0x4, offset = 0x4, fixed_abs, tag = 'smem constant byte address 0x4 - core index']
  #allocation1 [shape = 'u32[144,128]{1,0:T(1,128)}', space=vmem, size = 0x12000, scoped, tag = 'internal scratch']
  %s0 = inlined_call_operand.vmem [shape: f32[1,128], index: 0, kind: input, shape index: {}]
  %s1 = inlined_call_operand.vmem [shape: f32[128,256], index: 1, kind: input, shape index: {}]
  %s2 = inlined_call_operand.vmem [shape: f32[1,256], index: 2, kind: input, shape index: {}]
  %s3 = inlined_call_operand.vmem [shape: f32[256,32], index: 3, kind: input, shape index: {}]
  %s4 = inlined_call_operand.vmem [shape: f32[1,32], index: 4, kind: input, shape index: {}]
  %s5 = inlined_call_operand.vmem [shape: f32[1,32], index: 5, kind: output, shape index: {}]
  %s6 = sld [smem:[#allocation0]]
  $region30: #{simple_network_forward.1} parent=0
    _
  %s8 = ssub.s32 1, %s6
  %s9 = scalar_select 0, %s8, %s6
  // Predicated region
  $region2: #{simple_network_forward.1} parent=0 // pred_check
    _
  $region3: #{simple_network_forward.1} parent=0 // pred_check_branch
    %11 = sbr.rel (0) target = $region5
  $region4: #{simple_network_forward.1} parent=0 // pred_region
    _
  $region5: #{simple_network_forward.1} parent=0 // pred_fallthru
    _
  // Predicated region
  $region6: #{simple_network_forward.1} parent=0 // pred_check
    _
  $region7: #{simple_network_forward.1} parent=0 // pred_check_branch
    %13 = sbr.rel (0) target = $region9
  $region8: #{simple_network_forward.1} parent=0 // pred_region
    _
  $region9: #{simple_network_forward.1} parent=0 // pred_fallthru
    _
  // Predicated region
  $region10: #{simple_network_forward.1} parent=0 // pred_check
    _
  $region11: #{simple_network_forward.1} parent=0 // pred_check_branch
    %15 = sbr.rel (0) target = $region13
  $region12: #{simple_network_forward.1} parent=0 // pred_region
    _
  $region13: #{simple_network_forward.1} parent=0 // pred_fallthru
    _
  // Predicated region
  $region14: #{simple_network_forward.1} parent=0 // pred_check
    _
  $region15: #{simple_network_forward.1} parent=0 // pred_check_branch
    %17 = sbr.rel (0) target = $region17
  $region16: #{simple_network_forward.1} parent=0 // pred_region
    _
  $region17: #{simple_network_forward.1} parent=0 // pred_fallthru
    _
  // Predicated region
  $region18: #{simple_network_forward.1} parent=0 // pred_check
    _
  $region19: #{simple_network_forward.1} parent=0 // pred_check_branch
    %19 = sbr.rel (0) target = $region21
  $region20: #{simple_network_forward.1} parent=0 // pred_region
    _
  $region21: #{simple_network_forward.1} parent=0 // pred_fallthru
    _
  %v20 = vld [vmem:[%s0] sm:$0x1]
  %v21 = vld [vmem:[%s1] sm:$0xff]
  %v22 = vld [vmem:[%s1 + $0x8] sm:$0xff]
  %v23 = vld [vmem:[%s1 + $0x10] sm:$0xff]
  %v24 = vld [vmem:[%s1 + $0x18] sm:$0xff]
  %v25 = vld [vmem:[%s1 + $0x20] sm:$0xff]
  %v26 = vld [vmem:[%s1 + $0x28] sm:$0xff]
  %v27 = vld [vmem:[%s1 + $0x30] sm:$0xff]
  %v28 = vld [vmem:[%s1 + $0x38] sm:$0xff]
  %v29 = vld [vmem:[%s1 + $0x40] sm:$0xff]
  %v30 = vld [vmem:[%s1 + $0x48] sm:$0xff]
  %v31 = vld [vmem:[%s1 + $0x50] sm:$0xff]
  %v32 = vld [vmem:[%s1 + $0x58] sm:$0xff]
  %v33 = vld [vmem:[%s1 + $0x60] sm:$0xff]
  %v34 = vld [vmem:[%s1 + $0x68] sm:$0xff]
  %v35 = vld [vmem:[%s1 + $0x70] sm:$0xff]
  %v36 = vld [vmem:[%s1 + $0x78] sm:$0xff]
  %v37 = vld [vmem:[%s1 + $0x80] sm:$0xff]
  %v38 = vld [vmem:[%s1 + $0x88] sm:$0xff]
  %v39 = vld [vmem:[%s1 + $0x90] sm:$0xff]
  %v40 = vld [vmem:[%s1 + $0x98] sm:$0xff]
  %v41 = vld [vmem:[%s1 + $0xa0] sm:$0xff]
  %v42 = vld [vmem:[%s1 + $0xa8] sm:$0xff]
  %v43 = vld [vmem:[%s1 + $0xb0] sm:$0xff]
  %v44 = vld [vmem:[%s1 + $0xb8] sm:$0xff]
  %v45 = vld [vmem:[%s1 + $0xc0] sm:$0xff]
  %v46 = vld [vmem:[%s1 + $0xc8] sm:$0xff]
  %v47 = vld [vmem:[%s1 + $0xd0] sm:$0xff]
  %v48 = vld [vmem:[%s1 + $0xd8] sm:$0xff]
  %v49 = vld [vmem:[%s1 + $0xe0] sm:$0xff]
  %v50 = vld [vmem:[%s1 + $0xe8] sm:$0xff]
  %v51 = vld [vmem:[%s1 + $0xf0] sm:$0xff]
  %v52 = vld [vmem:[%s1 + $0xf8] sm:$0xff]
  %v53 = vld [vmem:[%s2] sm:$0x3]
  %v55 = vlaneseq
  %v56 = vshrl.u32 %v55, 7
  %v57 = vsub.s32 0, %v56
  %v58 = vrot.slane %v53, %v57
  %v59 = vlaneseq
  %v60 = vshrl.u32 %v59, 7
  %v61 = vsub.s32 1, %v60
  %v62 = vrot.slane %v53, %v61
  %65 = vmatprep.subr.mxu0 %v22
  %66 = vmatpush1.msra.mxu0 %v21
  %67 = vmatprep.subr.mxu0 %v24
  %68 = vmatpush1.msra.mxu0 %v23
  %69 = vmatprep.subr.mxu0 %v26
  %70 = vmatpush1.msra.mxu0 %v25
  %71 = vmatprep.subr.mxu0 %v28
  %72 = vmatpush1.msra.mxu0 %v27
  %73 = vmatprep.subr.mxu0 %v30
  %74 = vmatpush1.msra.mxu0 %v29
  %75 = vmatprep.subr.mxu0 %v32
  %76 = vmatpush1.msra.mxu0 %v31
  %77 = vmatprep.subr.mxu0 %v34
  %78 = vmatpush1.msra.mxu0 %v33
  %79 = vmatprep.subr.mxu0 %v36
  %80 = vmatpush1.msra.mxu0 %v35
  %81 = vmatprep.subr.mxu0 %v38
  %82 = vmatpush1.msra.mxu0 %v37
  %83 = vmatprep.subr.mxu0 %v40
  %84 = vmatpush1.msra.mxu0 %v39
  %85 = vmatprep.subr.mxu0 %v42
  %86 = vmatpush1.msra.mxu0 %v41
  %87 = vmatprep.subr.mxu0 %v44
  %88 = vmatpush1.msra.mxu0 %v43
  %89 = vmatprep.subr.mxu0 %v46
  %90 = vmatpush1.msra.mxu0 %v45
  %91 = vmatprep.subr.mxu0 %v48
  %92 = vmatpush1.msra.mxu0 %v47
  %93 = vmatprep.subr.mxu0 %v50
  %94 = vmatpush1.msra.mxu0 %v49
  %95 = vmatprep.subr.mxu0 %v52
  %96 = vmatpush1.msra.mxu0 %v51
  %97 = vmatprep.subr.mxu0 0.0
  %98 = vmatpush1.msra.mxu0 0.0
  %99 = vmatprep.subr.mxu0 0.0
  %100 = vmatpush1.msra.mxu0 0.0
  %101 = vmatprep.subr.mxu0 0.0
  %102 = vmatpush1.msra.mxu0 0.0
  %103 = vmatprep.subr.mxu0 0.0
  %104 = vmatpush1.msra.mxu0 0.0
  %105 = vmatprep.subr.mxu0 0.0
  %106 = vmatpush1.msra.mxu0 0.0
  %107 = vmatprep.subr.mxu0 0.0
  %108 = vmatpush1.msra.mxu0 0.0
  %109 = vmatprep.subr.mxu0 0.0
  %110 = vmatpush1.msra.mxu0 0.0
  %111 = vmatprep.subr.mxu0 0.0
  %112 = vmatpush1.msra.mxu0 0.0
  %113 = vmatprep.subr.mxu0 0.0
  %114 = vmatpush1.msra.mxu0 0.0
  %115 = vmatprep.subr.mxu0 0.0
  %116 = vmatpush1.msra.mxu0 0.0
  %117 = vmatprep.subr.mxu0 0.0
  %118 = vmatpush1.msra.mxu0 0.0
  %119 = vmatprep.subr.mxu0 0.0
  %120 = vmatpush1.msra.mxu0 0.0
  %121 = vmatprep.subr.mxu0 0.0
  %122 = vmatpush1.msra.mxu0 0.0
  %123 = vmatprep.subr.mxu0 0.0
  %124 = vmatpush1.msra.mxu0 0.0
  %125 = vmatprep.subr.mxu0 0.0
  %126 = vmatpush1.msra.mxu0 0.0
  %127 = vmatprep.subr.mxu0 0.0
  %128 = vmatpush1.msra.mxu0 0.0
  %129 = vmatprep.mubr.f32.mxu0 0.0
  %130 = vmatmul.mubr.f32.gmra.mrb[0].mxu0 %v20
  %v131 = vpop.f32.mrb[0].mxu0
  %v132 = vadd.f32 %v58, %v131
  %v133 = vpop.f32.mrb[0].mxu0
  %v134 = vadd.f32 %v62, %v133
  %135 = vdwg.mxu0
  %v136 = vmax.f32 %v132, 0.0
  %v137 = vmax.f32 %v134, 0.0
  %v138 = vld [vmem:[%s3] sm:$0xff]
  %v139 = vld [vmem:[%s3 + $0x8] sm:$0xff]
  %v140 = vld [vmem:[%s3 + $0x10] sm:$0xff]
  %v141 = vld [vmem:[%s3 + $0x18] sm:$0xff]
  %v142 = vld [vmem:[%s3 + $0x20] sm:$0xff]
  %v143 = vld [vmem:[%s3 + $0x28] sm:$0xff]
  %v144 = vld [vmem:[%s3 + $0x30] sm:$0xff]
  %v145 = vld [vmem:[%s3 + $0x38] sm:$0xff]
  %v146 = vld [vmem:[%s3 + $0x40] sm:$0xff]
  %v147 = vld [vmem:[%s3 + $0x48] sm:$0xff]
  %v148 = vld [vmem:[%s3 + $0x50] sm:$0xff]
  %v149 = vld [vmem:[%s3 + $0x58] sm:$0xff]
  %v150 = vld [vmem:[%s3 + $0x60] sm:$0xff]
  %v151 = vld [vmem:[%s3 + $0x68] sm:$0xff]
  %v152 = vld [vmem:[%s3 + $0x70] sm:$0xff]
  %v153 = vld [vmem:[%s3 + $0x78] sm:$0xff]
  %v154 = vld [vmem:[%s3 + $0x80] sm:$0xff]
  %v155 = vld [vmem:[%s3 + $0x88] sm:$0xff]
  %v156 = vld [vmem:[%s3 + $0x90] sm:$0xff]
  %v157 = vld [vmem:[%s3 + $0x98] sm:$0xff]
  %v158 = vld [vmem:[%s3 + $0xa0] sm:$0xff]
  %v159 = vld [vmem:[%s3 + $0xa8] sm:$0xff]
  %v160 = vld [vmem:[%s3 + $0xb0] sm:$0xff]
  %v161 = vld [vmem:[%s3 + $0xb8] sm:$0xff]
  %v162 = vld [vmem:[%s3 + $0xc0] sm:$0xff]
  %v163 = vld [vmem:[%s3 + $0xc8] sm:$0xff]
  %v164 = vld [vmem:[%s3 + $0xd0] sm:$0xff]
  %v165 = vld [vmem:[%s3 + $0xd8] sm:$0xff]
  %v166 = vld [vmem:[%s3 + $0xe0] sm:$0xff]
  %v167 = vld [vmem:[%s3 + $0xe8] sm:$0xff]
  %v168 = vld [vmem:[%s3 + $0xf0] sm:$0xff]
  %v169 = vld [vmem:[%s3 + $0xf8] sm:$0xff]
  %v170 = vld [vmem:[%s4] sm:$0x1]
  %171 = vmatprep.subr.mxu0 0.0
  %172 = vmatpush1.msra.mxu0 %v138
  %173 = vmatprep.subr.mxu0 0.0
  %174 = vmatpush1.msra.mxu0 %v139
  %175 = vmatprep.subr.mxu0 0.0
  %176 = vmatpush1.msra.mxu0 %v140
  %177 = vmatprep.subr.mxu0 0.0
  %178 = vmatpush1.msra.mxu0 %v141
  %179 = vmatprep.subr.mxu0 0.0
  %180 = vmatpush1.msra.mxu0 %v142
  %181 = vmatprep.subr.mxu0 0.0
  %182 = vmatpush1.msra.mxu0 %v143
  %183 = vmatprep.subr.mxu0 0.0
  %184 = vmatpush1.msra.mxu0 %v144
  %185 = vmatprep.subr.mxu0 0.0
  %186 = vmatpush1.msra.mxu0 %v145
  %187 = vmatprep.subr.mxu0 0.0
  %188 = vmatpush1.msra.mxu0 %v146
  %189 = vmatprep.subr.mxu0 0.0
  %190 = vmatpush1.msra.mxu0 %v147
  %191 = vmatprep.subr.mxu0 0.0
  %192 = vmatpush1.msra.mxu0 %v148
  %193 = vmatprep.subr.mxu0 0.0
  %194 = vmatpush1.msra.mxu0 %v149
  %195 = vmatprep.subr.mxu0 0.0
  %196 = vmatpush1.msra.mxu0 %v150
  %197 = vmatprep.subr.mxu0 0.0
  %198 = vmatpush1.msra.mxu0 %v151
  %199 = vmatprep.subr.mxu0 0.0
  %200 = vmatpush1.msra.mxu0 %v152
  %201 = vmatprep.subr.mxu0 0.0
  %202 = vmatpush1.msra.mxu0 %v153
  %203 = vmatprep.subr.mxu0 0.0
  %204 = vmatpush1.msra.mxu0 %v154
  %205 = vmatprep.subr.mxu0 0.0
  %206 = vmatpush1.msra.mxu0 %v155
  %207 = vmatprep.subr.mxu0 0.0
  %208 = vmatpush1.msra.mxu0 %v156
  %209 = vmatprep.subr.mxu0 0.0
  %210 = vmatpush1.msra.mxu0 %v157
  %211 = vmatprep.subr.mxu0 0.0
  %212 = vmatpush1.msra.mxu0 %v158
  %213 = vmatprep.subr.mxu0 0.0
  %214 = vmatpush1.msra.mxu0 %v159
  %215 = vmatprep.subr.mxu0 0.0
  %216 = vmatpush1.msra.mxu0 %v160
  %217 = vmatprep.subr.mxu0 0.0
  %218 = vmatpush1.msra.mxu0 %v161
  %219 = vmatprep.subr.mxu0 0.0
  %220 = vmatpush1.msra.mxu0 %v162
  %221 = vmatprep.subr.mxu0 0.0
  %222 = vmatpush1.msra.mxu0 %v163
  %223 = vmatprep.subr.mxu0 0.0
  %224 = vmatpush1.msra.mxu0 %v164
  %225 = vmatprep.subr.mxu0 0.0
  %226 = vmatpush1.msra.mxu0 %v165
  %227 = vmatprep.subr.mxu0 0.0
  %228 = vmatpush1.msra.mxu0 %v166
  %229 = vmatprep.subr.mxu0 0.0
  %230 = vmatpush1.msra.mxu0 %v167
  %231 = vmatprep.subr.mxu0 0.0
  %232 = vmatpush1.msra.mxu0 %v168
  %233 = vmatprep.subr.mxu0 0.0
  %234 = vmatpush1.msra.mxu0 %v169
  %235 = vmatprep.mubr.f32.mxu0 %v137
  %236 = vmatmul.mubr.f32.gmra.mrb[0].mxu0 %v136
  %v237 = vpop.f32.mrb[0].mxu0
  %v238 = vadd.f32 %v170, %v237
  %v239 = vpop.f32.mrb[0].mxu0
  %240 = vdwg.mxu0
  %vm241 = vcmask 253952
  %242 = vst.msk [vmem:[%s5] sm:$0x1] %vm241, %v238
  // Predicated region
  $region22: #{simple_network_forward.1} parent=0 // pred_check
    _
  $region23: #{simple_network_forward.1} parent=0 // pred_check_branch
    %244 = sbr.rel (0) target = $region25
  $region24: #{simple_network_forward.1} parent=0 // pred_region
    _
  $region25: #{simple_network_forward.1} parent=0 // pred_fallthru
    _
  // Predicated region
  $region26: #{simple_network_forward.1} parent=0 // pred_check
    _
  $region27: #{simple_network_forward.1} parent=0 // pred_check_branch
    %246 = sbr.rel (0) target = $region29
  $region28: #{simple_network_forward.1} parent=0 // pred_region
    _
  $region29: #{simple_network_forward.1} parent=0 // pred_fallthru
    _

</llo_original>
